<compile_context>
chip_gen: v5e
topology: v5e:2x2
jax: 0.10.0
libtpu: 0.0.40
codegen_flags: <defaults>
</compile_context>

<pallas_src>
import functools
import math

import jax
import jax.numpy as jnp
from jax.experimental import pallas as pl
from jax.experimental.pallas import tpu as pltpu


def _round_up(n, m):
    return ((n + m - 1) // m) * m


def dqn_kernel(x_ref, w1_ref, b1_ref, w2_ref, b2_ref, w3_ref, b3_ref, o_ref):
    # Transposed layout: batch on the lane axis.
    # x_ref: (in, TB) bf16   w*: (out, in) bf16   b*: (out, 1) f32   o_ref: (out, TB) f32
    x = x_ref[...]
    # fc1 + relu  (bf16 MXU inputs, f32 accumulate / bias / ReLU)
    h1 = jnp.dot(w1_ref[...], x, preferred_element_type=jnp.float32) + b1_ref[...]
    h1 = jnp.maximum(h1, 0.0)
    # fc2 + relu
    h2 = jnp.dot(w2_ref[...], h1.astype(jnp.bfloat16),
                 preferred_element_type=jnp.float32) + b2_ref[...]
    h2 = jnp.maximum(h2, 0.0)
    # fc3 (linear) -> lane-dense store (last dim = TB, multiple of 128)
    o_ref[...] = jnp.dot(w3_ref[...], h2.astype(jnp.bfloat16),
                         preferred_element_type=jnp.float32) + b3_ref[...]


def _choose_tb(B, tb_max):
    """Lane-aligned batch tile.

    Tiny batches -> one tile.  Larger batches -> at least 2 grid steps (so
    v7x's two TensorCores can split the "parallel" axis), capped at tb_max so
    per-step DMA is large enough to amortize grid overhead but in-kernel
    intermediates stay far under scoped VMEM.
    """
    full = _round_up(B, 128)
    if full <= 256:
        return full
    half = _round_up((B + 1) // 2, 128)
    return max(128, min(tb_max, half))


@functools.partial(jax.jit, static_argnames=("tb",))
def dqn_forward(x, params, tb=32768):
    """x: (B, input_size) float32  ->  (B, output_size) float32."""
    w1, b1, w2, b2, w3, b3 = params
    B, in_size = x.shape
    h_size = w1.shape[0]
    out_size = w3.shape[0]

    TB = _choose_tb(B, tb)
    grid = (pl.cdiv(B, TB),)  # ragged last block handled by Pallas (masked writes)

    # bf16 inputs to the MXU; biases stay f32 as (out, 1) to broadcast over lanes.
    xt = x.T.astype(jnp.bfloat16)                       # (in, B), fused inside jit
    w1b = w1.astype(jnp.bfloat16)
    w2b = w2.astype(jnp.bfloat16)
    w3b = w3.astype(jnp.bfloat16)

    resident = lambda a: pl.BlockSpec(a.shape, lambda i: (0, 0))  # VMEM-resident

    cost = pl.CostEstimate(
        flops=2 * B * (in_size * h_size + h_size * h_size + h_size * out_size),
        transcendentals=0,
        bytes_accessed=(2 * B * in_size + 4 * B * out_size
                        + 2 * (w1.size + w2.size + w3.size)
                        + 4 * (b1.size + b2.size + b3.size)),
    )

    out_t = pl.pallas_call(
        dqn_kernel,
        out_shape=jax.ShapeDtypeStruct((out_size, B), jnp.float32),
        grid=grid,
        in_specs=[
            pl.BlockSpec((in_size, TB), lambda i: (0, i)),   # x tiles stream
            resident(w1b), resident(b1),
            resident(w2b), resident(b2),
            resident(w3b), resident(b3),
        ],
        out_specs=pl.BlockSpec((out_size, TB), lambda i: (0, i)),
        compiler_params=pltpu.CompilerParams(
            dimension_semantics=("parallel",),               # 2 TCs on v7x
        ),
        cost_estimate=cost,
    )(xt, w1b, b1, w2b, b2, w3b, b3)

    # Transpose-back stays inside the jit so it fuses with the kernel output.
    return out_t.T


# ----------------------------- init & reference -----------------------------

def xavier_uniform(key, fan_out, fan_in):
    # matches nn.init.xavier_uniform_ (gain=1); stored as (out, in) like PyTorch.
    limit = math.sqrt(6.0 / (fan_in + fan_out))
    return jax.random.uniform(key, (fan_out, fan_in), jnp.float32, -limit, limit)


def linear_bias(key, fan_out, fan_in):
    # matches torch.nn.Linear default bias init: U(-1/sqrt(fan_in), 1/sqrt(fan_in)).
    # stored as (out, 1) so it broadcasts along the lane (batch) axis in-kernel.
    bound = 1.0 / math.sqrt(fan_in)
    return jax.random.uniform(key, (fan_out, 1), jnp.float32, -bound, bound)


def init_dqn_params(key, input_size, output_size, h_size=32):
    k1, k2, k3, k4, k5, k6 = jax.random.split(key, 6)
    w1 = xavier_uniform(k1, h_size, input_size)
    b1 = linear_bias(k2, h_size, input_size)
    w2 = xavier_uniform(k3, h_size, h_size)
    b2 = linear_bias(k4, h_size, h_size)
    w3 = xavier_uniform(k5, output_size, h_size)
    b3 = linear_bias(k6, output_size, h_size)
    return (w1, b1, w2, b2, w3, b3)


def reference_forward(x, params):
    w1, b1, w2, b2, w3, b3 = params
    h1 = jnp.maximum(x @ w1.T + b1.T, 0.0)
    h2 = jnp.maximum(h1 @ w2.T + b2.T, 0.0)
    return h2 @ w3.T + b3.T


# TODO(synk): DQN.update (Adam step + MSE loss backward) and DQN.predict are
# training/host utilities, not part of the forward pass; only forward is a kernel.

if __name__ == "__main__":
    # CartPole-v0: observation dim = 4, action dim = 2
    input_size, output_size, h_size = 4, 2, 32

    key = jax.random.PRNGKey(0)
    k_params, k_x1, k_x2 = jax.random.split(key, 3)
    params = init_dqn_params(k_params, input_size, output_size, h_size)

    # bf16 MXU path -> loosened tolerance vs the f32 reference.
    ATOL = RTOL = 5e-2

    # Small single-tile case (batch < 128: one ragged lane tile, masked write).
    x_small = jax.random.normal(k_x1, (8, input_size), jnp.float32)
    out_small = jax.block_until_ready(dqn_forward(x_small, params))
    ref_small = jax.block_until_ready(reference_forward(x_small, params))
    assert out_small.shape == (8, output_size)
    assert jnp.allclose(out_small, ref_small, atol=ATOL, rtol=RTOL)

    # Multi-tile case: non-multiple batch, small tile -> 3 grid steps, ragged tail.
    x_big = jax.random.normal(k_x2, (600, input_size), jnp.float32)
    out_big = jax.block_until_ready(dqn_forward(x_big, params, tb=256))
    ref_big = jax.block_until_ready(reference_forward(x_big, params))
    assert out_big.shape == (600, output_size)
    assert jnp.allclose(out_big, ref_big, atol=ATOL, rtol=RTOL)

    # Default (large-tile) path on the same data: grid of 2 via the >=2-step rule.
    out_big2 = jax.block_until_ready(dqn_forward(x_big, params))
    assert jnp.allclose(out_big2, ref_big, atol=ATOL, rtol=RTOL)

    print("KERNEL_OK")
</pallas_src>

<mosaic_0001>
module attributes {stable_mosaic.version = 11 : i64} {
  func.func @dqn_kernel(%arg0: i32, %arg1: memref<4x128xbf16, #tpu.memory_space<vmem>>, %arg2: memref<32x4xbf16, #tpu.memory_space<vmem>>, %arg3: memref<32x1xf32, #tpu.memory_space<vmem>>, %arg4: memref<32x32xbf16, #tpu.memory_space<vmem>>, %arg5: memref<32x1xf32, #tpu.memory_space<vmem>>, %arg6: memref<2x32xbf16, #tpu.memory_space<vmem>>, %arg7: memref<2x1xf32, #tpu.memory_space<vmem>>, %arg8: memref<2x128xf32, #tpu.memory_space<vmem>>) attributes {dimension_semantics = [#tpu.dimension_semantics<parallel>], iteration_bounds = array<i64: 1>, scalar_prefetch = 0 : i64, scratch_operands = 0 : i64, tpu.core_type = #tpu.core_type<tc>, window_params = [{transform_indices = @transform_0, window_bounds = array<i64: 4, 128>}, {pipeline_mode = #tpu.pipeline_mode<synchronous>, transform_indices = @transform_1, window_bounds = array<i64: 32, 4>}, {pipeline_mode = #tpu.pipeline_mode<synchronous>, transform_indices = @transform_2, window_bounds = array<i64: 32, 1>}, {pipeline_mode = #tpu.pipeline_mode<synchronous>, transform_indices = @transform_3, window_bounds = array<i64: 32, 32>}, {pipeline_mode = #tpu.pipeline_mode<synchronous>, transform_indices = @transform_4, window_bounds = array<i64: 32, 1>}, {pipeline_mode = #tpu.pipeline_mode<synchronous>, transform_indices = @transform_5, window_bounds = array<i64: 2, 32>}, {pipeline_mode = #tpu.pipeline_mode<synchronous>, transform_indices = @transform_6, window_bounds = array<i64: 2, 1>}, {transform_indices = @transform_7, window_bounds = array<i64: 2, 128>}]} {
    %c0 = arith.constant 0 : index
    %c0_0 = arith.constant 0 : index
    %0 = vector.load %arg1[%c0, %c0_0] : memref<4x128xbf16, #tpu.memory_space<vmem>>, vector<4x128xbf16>
    %c0_1 = arith.constant 0 : index
    %c0_2 = arith.constant 0 : index
    %1 = vector.load %arg2[%c0_1, %c0_2] : memref<32x4xbf16, #tpu.memory_space<vmem>>, vector<32x4xbf16>
    %cst = arith.constant dense<0.000000e+00> : vector<32x128xf32>
    %2 = tpu.matmul %1, %0, %cst {dimension_numbers = #tpu.dot_dimension_numbers<[1], [0], [0], [1], [0, 0, 1, 1], [], []>} : vector<32x4xbf16>, vector<4x128xbf16>, vector<32x128xf32> -> vector<32x128xf32>
    %c0_3 = arith.constant 0 : index
    %c0_4 = arith.constant 0 : index
    %3 = vector.load %arg3[%c0_3, %c0_4] : memref<32x1xf32, #tpu.memory_space<vmem>>, vector<32x1xf32>
    %4 = vector.broadcast %3 : vector<32x1xf32> to vector<32x128xf32>
    %5 = arith.addf %2, %4 : vector<32x128xf32>
    %cst_5 = arith.constant 0.000000e+00 : f32
    %6 = vector.broadcast %cst_5 : f32 to vector<32x128xf32>
    %7 = arith.maximumf %5, %6 : vector<32x128xf32>
    %c0_6 = arith.constant 0 : index
    %c0_7 = arith.constant 0 : index
    %8 = vector.load %arg4[%c0_6, %c0_7] : memref<32x32xbf16, #tpu.memory_space<vmem>>, vector<32x32xbf16>
    %9 = arith.truncf %7 : vector<32x128xf32> to vector<32x128xbf16>
    %cst_8 = arith.constant dense<0.000000e+00> : vector<32x128xf32>
    %10 = tpu.matmul %8, %9, %cst_8 {dimension_numbers = #tpu.dot_dimension_numbers<[1], [0], [0], [1], [0, 0, 1, 1], [], []>} : vector<32x32xbf16>, vector<32x128xbf16>, vector<32x128xf32> -> vector<32x128xf32>
    %c0_9 = arith.constant 0 : index
    %c0_10 = arith.constant 0 : index
    %11 = vector.load %arg5[%c0_9, %c0_10] : memref<32x1xf32, #tpu.memory_space<vmem>>, vector<32x1xf32>
    %12 = vector.broadcast %11 : vector<32x1xf32> to vector<32x128xf32>
    %13 = arith.addf %10, %12 : vector<32x128xf32>
    %cst_11 = arith.constant 0.000000e+00 : f32
    %14 = vector.broadcast %cst_11 : f32 to vector<32x128xf32>
    %15 = arith.maximumf %13, %14 : vector<32x128xf32>
    %c0_12 = arith.constant 0 : index
    %c0_13 = arith.constant 0 : index
    %16 = vector.load %arg6[%c0_12, %c0_13] : memref<2x32xbf16, #tpu.memory_space<vmem>>, vector<2x32xbf16>
    %17 = arith.truncf %15 : vector<32x128xf32> to vector<32x128xbf16>
    %cst_14 = arith.constant dense<0.000000e+00> : vector<2x128xf32>
    %18 = tpu.matmul %16, %17, %cst_14 {dimension_numbers = #tpu.dot_dimension_numbers<[1], [0], [0], [1], [0, 0, 1, 1], [], []>} : vector<2x32xbf16>, vector<32x128xbf16>, vector<2x128xf32> -> vector<2x128xf32>
    %c0_15 = arith.constant 0 : index
    %c0_16 = arith.constant 0 : index
    %19 = vector.load %arg7[%c0_15, %c0_16] : memref<2x1xf32, #tpu.memory_space<vmem>>, vector<2x1xf32>
    %20 = vector.broadcast %19 : vector<2x1xf32> to vector<2x128xf32>
    %21 = arith.addf %18, %20 : vector<2x128xf32>
    %c0_17 = arith.constant 0 : index
    %c0_18 = arith.constant 0 : index
    %22 = vector.load %arg8[%c0_17, %c0_18] : memref<2x128xf32, #tpu.memory_space<vmem>>, vector<2x128xf32>
    tpu.vector_store %arg8[%c0_17, %c0_18], %21 {strides = array<i32>} : memref<2x128xf32, #tpu.memory_space<vmem>>, vector<2x128xf32>,
    return
  }
  func.func @transform_0(%arg0: i32) -> (i32, i32) {
    %c0_i32 = arith.constant 0 : i32
    %c0_i32_0 = arith.constant 0 : i32
    return %c0_i32, %arg0 : i32, i32
  }
  func.func @transform_1(%arg0: i32) -> (i32, i32) {
    %c0_i32 = arith.constant 0 : i32
    %c0_i32_0 = arith.constant 0 : i32
    %c0_i32_1 = arith.constant 0 : i32
    return %c0_i32, %c0_i32_0 : i32, i32
  }
  func.func @transform_2(%arg0: i32) -> (i32, i32) {
    %c0_i32 = arith.constant 0 : i32
    %c0_i32_0 = arith.constant 0 : i32
    %c0_i32_1 = arith.constant 0 : i32
    return %c0_i32, %c0_i32_0 : i32, i32
  }
  func.func @transform_3(%arg0: i32) -> (i32, i32) {
    %c0_i32 = arith.constant 0 : i32
    %c0_i32_0 = arith.constant 0 : i32
    %c0_i32_1 = arith.constant 0 : i32
    return %c0_i32, %c0_i32_0 : i32, i32
  }
  func.func @transform_4(%arg0: i32) -> (i32, i32) {
    %c0_i32 = arith.constant 0 : i32
    %c0_i32_0 = arith.constant 0 : i32
    %c0_i32_1 = arith.constant 0 : i32
    return %c0_i32, %c0_i32_0 : i32, i32
  }
  func.func @transform_5(%arg0: i32) -> (i32, i32) {
    %c0_i32 = arith.constant 0 : i32
    %c0_i32_0 = arith.constant 0 : i32
    %c0_i32_1 = arith.constant 0 : i32
    return %c0_i32, %c0_i32_0 : i32, i32
  }
  func.func @transform_6(%arg0: i32) -> (i32, i32) {
    %c0_i32 = arith.constant 0 : i32
    %c0_i32_0 = arith.constant 0 : i32
    %c0_i32_1 = arith.constant 0 : i32
    return %c0_i32, %c0_i32_0 : i32, i32
  }
  func.func @transform_7(%arg0: i32) -> (i32, i32) {
    %c0_i32 = arith.constant 0 : i32
    %c0_i32_0 = arith.constant 0 : i32
    return %c0_i32, %arg0 : i32, i32
  }
}

</mosaic_0001>

<llo_original>
// kernel: dqn_forward.1
$region0: #{dqn_forward.1}
  #allocation0 [shape = 'u32[]', space=smem, size = 0x4, offset = 0x4, fixed_abs, tag = 'smem constant byte address 0x4 - core index']
  #allocation1 [shape = 'u32[72,128]{1,0:T(1,128)}', space=vmem, size = 0x9000, scoped, tag = 'internal scratch']
  %s0 = inlined_call_operand.vmem [shape: bf16[4,8], index: 0, kind: input, shape index: {}]
  %s1 = inlined_call_operand.vmem [shape: bf16[32,4], index: 1, kind: input, shape index: {}]
  %s2 = inlined_call_operand.vmem [shape: f32[32,1], index: 2, kind: input, shape index: {}]
  %s3 = inlined_call_operand.vmem [shape: bf16[32,32], index: 3, kind: input, shape index: {}]
  %s4 = inlined_call_operand.vmem [shape: f32[32,1], index: 4, kind: input, shape index: {}]
  %s5 = inlined_call_operand.vmem [shape: bf16[2,32], index: 5, kind: input, shape index: {}]
  %s6 = inlined_call_operand.vmem [shape: f32[2,1], index: 6, kind: input, shape index: {}]
  %s7 = inlined_call_operand.hbm [shape: f32[2,8], index: 7, kind: output, shape index: {}]
  %s8 = sld [smem:[#allocation0]]
  $region38: #{dqn_forward.1} parent=0
    _
  %s10 = ssub.s32 1, %s8
  %s11 = scalar_select 0, %s10, %s8
  $region1: #{dqn_forward.1} parent=0
    #allocation2 [shape = 'u8[1024]{0}', space=vmem, size = 0x400, scoped, tag = 'output window, operand 0, single buffered']
    #allocation3 [shape = 's32[1]{0}', space=sflag, size = 0x4, scoped, tag = 'scoped memory for dqn_forward.1']
    %12 = vsyncpa [#allocation3], 0
    // Predicated region
    $region2: #{dqn_forward.1} parent=1 // pred_check
      _
    $region3: #{dqn_forward.1} parent=1 // pred_check_branch
      %14 = sbr.rel (0) target = $region5
    $region4: #{dqn_forward.1} parent=1 // pred_region
      _
    $region5: #{dqn_forward.1} parent=1 // pred_fallthru
      _
    // Predicated region
    $region6: #{dqn_forward.1} parent=1 // pred_check
      _
    $region7: #{dqn_forward.1} parent=1 // pred_check_branch
      %16 = sbr.rel (0) target = $region9
    $region8: #{dqn_forward.1} parent=1 // pred_region
      _
    $region9: #{dqn_forward.1} parent=1 // pred_fallthru
      _
    // Predicated region
    $region10: #{dqn_forward.1} parent=1 // pred_check
      _
    $region11: #{dqn_forward.1} parent=1 // pred_check_branch
      %18 = sbr.rel (0) target = $region13
    $region12: #{dqn_forward.1} parent=1 // pred_region
      _
    $region13: #{dqn_forward.1} parent=1 // pred_fallthru
      _
    // Predicated region
    $region14: #{dqn_forward.1} parent=1 // pred_check
      _
    $region15: #{dqn_forward.1} parent=1 // pred_check_branch
      %20 = sbr.rel (0) target = $region17
    $region16: #{dqn_forward.1} parent=1 // pred_region
      _
    $region17: #{dqn_forward.1} parent=1 // pred_fallthru
      _
    // Predicated region
    $region18: #{dqn_forward.1} parent=1 // pred_check
      _
    $region19: #{dqn_forward.1} parent=1 // pred_check_branch
      %22 = sbr.rel (0) target = $region21
    $region20: #{dqn_forward.1} parent=1 // pred_region
      _
    $region21: #{dqn_forward.1} parent=1 // pred_fallthru
      _
    // Predicated region
    $region22: #{dqn_forward.1} parent=1 // pred_check
      _
    $region23: #{dqn_forward.1} parent=1 // pred_check_branch
      %24 = sbr.rel (0) target = $region25
    $region24: #{dqn_forward.1} parent=1 // pred_region
      _
    $region25: #{dqn_forward.1} parent=1 // pred_fallthru
      _
    // Predicated region
    $region26: #{dqn_forward.1} parent=1 // pred_check
      _
    $region27: #{dqn_forward.1} parent=1 // pred_check_branch
      %26 = sbr.rel (0) target = $region29
    $region28: #{dqn_forward.1} parent=1 // pred_region
      _
    $region29: #{dqn_forward.1} parent=1 // pred_fallthru
      _
    %v28 = vld [vmem:[%s0] sm:$0x3]
    %v29 = vld [vmem:[%s1] sm:$0xf]
    %v30 = vld [vmem:[%s1 + $0x4] sm:$0xf]
    %v31 = vld [vmem:[%s1 + $0x8] sm:$0xf]
    %v32 = vld [vmem:[%s1 + $0xc] sm:$0xf]
    %v33 = vld [vmem:[%s2] sm:$0xff]
    %v34 = vld [vmem:[%s2 + $0x8] sm:$0xff]
    %v35 = vld [vmem:[%s2 + $0x10] sm:$0xff]
    %v36 = vld [vmem:[%s2 + $0x18] sm:$0xff]
    %38 = vset.pattern.permute.xlu0 0
    %39 = vperm.xlu0 %38, %v33
    %v40 = vpop.permute.xlu0 %39
    %43 = vset.pattern.permute.xlu0 0
    %44 = vperm.xlu0 %43, %v34
    %v45 = vpop.permute.xlu0 %44
    %48 = vset.pattern.permute.xlu0 0
    %49 = vperm.xlu0 %48, %v35
    %v50 = vpop.permute.xlu0 %49
    %53 = vset.pattern.permute.xlu0 0
    %54 = vperm.xlu0 %53, %v36
    %v55 = vpop.permute.xlu0 %54
    %v61 = vunpack.c.l.b16 %v29
    %v62 = vunpack.c.l.b16 %v30
    %v63 = vunpack.c.l.b16 %v31
    %v64 = vunpack.c.l.b16 %v32
    %v65 = vpack.c.b16 %v62, %v61
    %v66 = vpack.c.b16 %v64, %v63
    %vm67 = vcmask 31744
    %v69 = vsel %vm67, %v65, 0
    %v72 = vsel %vm67, %v66, 0
    %vm74 = vcmask 1041408
    %v76 = vsel %vm74, %v28, 0
    %78 = vmatpush.bf16.msra.mxu0 0
    %79 = vmatpush.bf16.msra.mxu0 0
    %80 = vmatpush.bf16.msra.mxu0 0
    %81 = vmatpush.bf16.msra.mxu0 0
    %82 = vmatpush.bf16.msra.mxu0 0
    %83 = vmatpush.bf16.msra.mxu0 0
    %84 = vmatpush.bf16.msra.mxu0 0
    %85 = vmatpush.bf16.msra.mxu0 %v76
    %86 = vmatmul.bf16.gmra.mxu0 %v69
    %v87 = vpop.f32.mrf.mxu0
    %v88 = vadd.f32 %v40, %v87
    %v89 = vpop.f32.mrf.mxu0
    %v90 = vadd.f32 %v45, %v89
    %91 = vmatmul.bf16.gmra.mxu0 %v72
    %v92 = vpop.f32.mrf.mxu0
    %v93 = vadd.f32 %v50, %v92
    %v94 = vpop.f32.mrf.mxu0
    %v95 = vadd.f32 %v55, %v94
    %96 = vdwg.mxu0
    %v97 = vmax.f32 %v88, 0.0
    %v98 = vmax.f32 %v90, 0.0
    %v99 = vmax.f32 %v93, 0.0
    %v100 = vmax.f32 %v95, 0.0
    %v101 = vld [vmem:[%s3] sm:$0xf]
    %v102 = vld [vmem:[%s3 + $0x4] sm:$0xf]
    %v103 = vld [vmem:[%s3 + $0x8] sm:$0xf]
    %v104 = vld [vmem:[%s3 + $0xc] sm:$0xf]
    %v105 = vpack.c.bf16 %v98, %v97
    %v106 = vpack.c.bf16 %v100, %v99
    %v107 = vld [vmem:[%s4] sm:$0xff]
    %v108 = vld [vmem:[%s4 + $0x8] sm:$0xff]
    %v109 = vld [vmem:[%s4 + $0x10] sm:$0xff]
    %v110 = vld [vmem:[%s4 + $0x18] sm:$0xff]
    %112 = vset.pattern.permute.xlu0 0
    %113 = vperm.xlu0 %112, %v107
    %v114 = vpop.permute.xlu0 %113
    %117 = vset.pattern.permute.xlu0 0
    %118 = vperm.xlu0 %117, %v108
    %v119 = vpop.permute.xlu0 %118
    %122 = vset.pattern.permute.xlu0 0
    %123 = vperm.xlu0 %122, %v109
    %v124 = vpop.permute.xlu0 %123
    %127 = vset.pattern.permute.xlu0 0
    %128 = vperm.xlu0 %127, %v110
    %v129 = vpop.permute.xlu0 %128
    %v135 = vunpack.c.l.b16 %v101
    %v136 = vunpack.c.l.b16 %v102
    %v137 = vunpack.c.l.b16 %v103
    %v138 = vunpack.c.l.b16 %v104
    %v139 = vpack.c.b16 %v136, %v135
    %v140 = vpack.c.b16 %v138, %v137
    %vm141 = vcmask 261120
    %v143 = vsel %vm141, %v139, 0
    %v146 = vsel %vm141, %v140, 0
    %148 = vmatpush.bf16.msra.mxu0 0
    %149 = vmatpush.bf16.msra.mxu0 0
    %150 = vmatpush.bf16.msra.mxu0 0
    %151 = vmatpush.bf16.msra.mxu0 0
    %152 = vmatpush.bf16.msra.mxu0 0
    %153 = vmatpush.bf16.msra.mxu0 0
    %154 = vmatpush.bf16.msra.mxu0 %v106
    %155 = vmatpush.bf16.msra.mxu0 %v105
    %156 = vmatmul.bf16.gmra.mxu0 %v143
    %v157 = vpop.f32.mrf.mxu0
    %v158 = vadd.f32 %v114, %v157
    %v159 = vpop.f32.mrf.mxu0
    %v160 = vadd.f32 %v119, %v159
    %161 = vmatmul.bf16.gmra.mxu0 %v146
    %v162 = vpop.f32.mrf.mxu0
    %v163 = vadd.f32 %v124, %v162
    %v164 = vpop.f32.mrf.mxu0
    %v165 = vadd.f32 %v129, %v164
    %166 = vdwg.mxu0
    %v167 = vmax.f32 %v158, 0.0
    %v168 = vmax.f32 %v160, 0.0
    %v169 = vmax.f32 %v163, 0.0
    %v170 = vmax.f32 %v165, 0.0
    %v171 = vld [vmem:[%s5] sm:$0x1]
    %v172 = vpack.c.bf16 %v168, %v167
    %v173 = vpack.c.bf16 %v170, %v169
    %v174 = vld [vmem:[%s6] sm:$0x3]
    %176 = vset.pattern.permute.xlu0 0
    %177 = vperm.xlu0 %176, %v174
    %v178 = vpop.permute.xlu0 %177
    %v181 = vsel %vm141, %v171, 0
    %183 = vmatpush.bf16.msra.mxu0 0
    %184 = vmatpush.bf16.msra.mxu0 0
    %185 = vmatpush.bf16.msra.mxu0 0
    %186 = vmatpush.bf16.msra.mxu0 0
    %187 = vmatpush.bf16.msra.mxu0 0
    %188 = vmatpush.bf16.msra.mxu0 0
    %189 = vmatpush.bf16.msra.mxu0 %v173
    %190 = vmatpush.bf16.msra.mxu0 %v172
    %191 = vmatmul.bf16.gmra.mxu0 %v181
    %v192 = vpop.f32.mrf.mxu0
    %v193 = vadd.f32 %v178, %v192
    %v194 = vpop.f32.mrf.mxu0
    %195 = vdwg.mxu0
    %196 = vst [vmem:[#allocation2] sm:$0x3] %v193
    // Predicated region
    $region30: #{dqn_forward.1} parent=1 // pred_check
      _
    $region31: #{dqn_forward.1} parent=1 // pred_check_branch
      %198 = sbr.rel (0) target = $region33
    $region32: #{dqn_forward.1} parent=1 // pred_region
      %200 = vsyncadd [#allocation3], 0
      %s202 = sshll.u32 [#allocation2], 4
      %s203 = int_to_ptr.vmem [resolvable:$true] %s202
      %s204 = sshll.u32 %s7, 4
      %s205 = int_to_ptr.hbm [resolvable:$true] %s204
      %207 = dma.vmem_to_hbm [thread:$0]  %s203, 32, %s205, [#allocation3]
    $region33: #{dqn_forward.1} parent=1 // pred_fallthru
      _
    // Predicated region
    $region34: #{dqn_forward.1} parent=1 // pred_check
      _
    $region35: #{dqn_forward.1} parent=1 // pred_check_branch
      %209 = sbr.rel (0) target = $region37
    $region36: #{dqn_forward.1} parent=1 // pred_region
      %211 = dma.done [#allocation3], 32
    $region37: #{dqn_forward.1} parent=1 // pred_fallthru
      _
    %212 = vsyncpa [#allocation3], 1

</llo_original>
